<compile_context>
chip_gen: v7x
topology: tpu7x:2x2x1
jax: 0.10.0
libtpu: 0.0.40
codegen_flags: <defaults>
</compile_context>

<pallas_src>
import functools
import numpy as np
import jax
import jax.numpy as jnp
from jax.experimental import pallas as pl
from jax.experimental.pallas import tpu as pltpu


def _round_up(x, m):
    return ((x + m - 1) // m) * m


def _arlstm_kernel(xproj_ref, whc_ref, hc_ref, hc_s):
    """One (batch_tile, time_chunk) grid step of the AR-LSTM recurrence.

    xproj_ref: (TC, BT, 4H) exogenous gate projection (+ biases, fc-feedback
               bias, step-0 init_state correction), i/f/o columns pre-scaled
               by 0.5 for the single-tanh trick.
    whc_ref:   (2H, 4H) fused recurrent weight [W_hh^T ; W_cc], same scaling.
    hc_ref:    (TC, BT, 2H) output block: per-step [h_t | c_t].
    hc_s:      (BT, 2H) state scratch, persists across time chunks.
    """
    g = pl.program_id(1)                      # time-chunk axis (axis 1)
    TC, BT, G = xproj_ref.shape
    H = G // 4

    @pl.when(g == 0)
    def _():
        hc_s[...] = jnp.zeros_like(hc_s)      # h_0 = c_0 = 0 per batch tile

    whc = whc_ref[...]                        # hoisted out of the step loop

    # sigmoid(x) = 0.5*tanh(x/2) + 0.5 ; the /2 is already folded into the
    # i/f/o gate columns, so a single tanh covers all four gates.
    lane = jax.lax.broadcasted_iota(jnp.int32, (BT, G), 1)
    g_mask = (lane >= 2 * H) & (lane < 3 * H)

    def step(t, hc_prev):
        gates = xproj_ref[t] + jnp.dot(hc_prev, whc,
                                       preferred_element_type=jnp.float32)
        tg = jnp.tanh(gates)                              # one EUP pass, 4H wide
        act = jnp.where(g_mask, tg, 0.5 * tg + 0.5)       # sigmoid lanes via VPU
        i_g = act[:, 0:H]
        f_g = act[:, H:2 * H]
        g_g = act[:, 2 * H:3 * H]
        o_g = act[:, 3 * H:4 * H]
        c_prev = hc_prev[:, H:]
        c_new = f_g * c_prev + i_g * g_g
        h_new = o_g * jnp.tanh(c_new)
        hc_new = jnp.concatenate([h_new, c_new], axis=-1)  # (BT, 2H)
        hc_ref[t] = hc_new                                 # single store per step
        return hc_new

    hc_fin = jax.lax.fori_loop(0, TC, step, hc_s[...],
                               unroll=True if TC <= 16 else 8)
    hc_s[...] = hc_fin                        # carry state to next time chunk


def arlstm_forward(init_state, xa, params, *, lstm_hidden, batch_first=True,
                   time_chunk=None, batch_tile=None,
                   vmem_budget_bytes=8 << 20):
    """init_state: (B, 2), xa: (B, T, 9) batch-first.  Returns (m_out, c)."""
    W_ih, W_hh, b_ih, b_hh, W_fc, b_fc = params
    f32 = jnp.float32
    B = init_state.shape[0]
    T = xa.shape[1]
    F = xa.shape[2]                           # 9 exogenous features (2 + 9 = 11)
    H = lstm_hidden
    G = 4 * H
    H2 = 2 * H

    # --- batch padding / tiling ('parallel' axis -> both v7x TensorCores) ----
    Bp0 = _round_up(B, 8)
    if batch_tile is None:
        batch_tile = Bp0 if Bp0 < 16 else _round_up((Bp0 + 1) // 2, 8)
    BT = _round_up(min(batch_tile, Bp0), 8)
    n_bt = pl.cdiv(Bp0, BT)
    Bp = n_bt * BT

    # --- time chunk derived from a VMEM budget (double-buffered in + out) ----
    per_tc_bytes = 8 * BT * (G + H2)          # f32, 2x buffered xproj + hc blocks
    if time_chunk is None:
        time_chunk = max(1, vmem_budget_bytes // per_tc_bytes)
    TC = int(max(1, min(time_chunk, T)))
    n_chunks = pl.cdiv(T, TC)
    T_pad = n_chunks * TC
    vmem_needed = TC * per_tc_bytes + 2 * H2 * G * 4 + BT * H2 * 4
    vmem_limit = int(min(48 << 20, max(vmem_needed + (2 << 20), 16 << 20)))

    # --- fold fc feedback into the recurrence; gate-space weights ------------
    W_ct = jnp.transpose(W_ih[:, :2]).astype(f32)          # (2, 4H)  ct -> gates
    W_x = jnp.transpose(W_ih[:, 2:]).astype(f32)           # (F, 4H)  xa -> gates
    Whh_t = jnp.transpose(W_hh).astype(f32)                 # (H, 4H)
    Wfc_t = jnp.transpose(W_fc).astype(f32)                 # (H, 2)
    Wcc = Wfc_t @ W_ct                                       # (H, 4H) fc folded in
    fc_gate_bias = b_fc.astype(f32) @ W_ct                   # (4H,)
    gate_bias = (b_ih + b_hh).astype(f32) + fc_gate_bias     # (4H,)

    # single-tanh trick: scale the sigmoid (i, f, o) gate columns by 0.5
    col_scale = jnp.concatenate([jnp.full((2 * H,), 0.5, f32),
                                 jnp.ones((H,), f32),
                                 jnp.full((H,), 0.5, f32)])
    Whc = jnp.concatenate([Whh_t, Wcc], axis=0) * col_scale  # (2H, 4H) fused weight

    # --- hoisted exogenous projection: one large GEMM, time-major ------------
    init_p = jnp.zeros((Bp, 2), f32).at[:B].set(init_state.astype(f32))
    xa_tm = jnp.transpose(xa.astype(f32), (1, 0, 2))         # (T, B, F)
    xa_p = jnp.zeros((T_pad, Bp, F), f32).at[:T, :B].set(xa_tm)
    xproj = jnp.einsum('tbf,fg->tbg', xa_p, W_x) + gate_bias
    # step 0 feeds init_state (not fc(c_prev)) as the autoregressive input:
    xproj = xproj.at[0].add(init_p @ W_ct - fc_gate_bias)
    xproj = xproj * col_scale                                 # (T_pad, Bp, 4H)

    grid_spec = pltpu.PrefetchScalarGridSpec(
        num_scalar_prefetch=0,
        grid=(n_bt, n_chunks),
        in_specs=[
            pl.BlockSpec((TC, BT, G), lambda bt, g: (g, bt, 0)),   # xproj chunk
            pl.BlockSpec((H2, G), lambda bt, g: (0, 0)),           # fused weight
        ],
        out_specs=pl.BlockSpec((TC, BT, H2), lambda bt, g: (g, bt, 0)),
        scratch_shapes=[pltpu.VMEM((BT, H2), jnp.float32)],        # hc state
    )

    hc = pl.pallas_call(
        _arlstm_kernel,
        grid_spec=grid_spec,
        out_shape=jax.ShapeDtypeStruct((T_pad, Bp, H2), jnp.float32),
        compiler_params=pltpu.CompilerParams(
            dimension_semantics=("parallel", "arbitrary"),
            vmem_limit_bytes=vmem_limit),
    )(xproj, Whc)

    hc = hc[:T, :B]                               # (T, B, 2H) valid rows only
    m_tm = hc[..., :H]                            # (T, B, H)  = h_t
    c_cell = hc[..., H:]                          # (T, B, H)  = c_t (cell state)
    c_fc = c_cell @ Wfc_t + b_fc.astype(f32)      # wrapper-side fc GEMM (lane-dense)
    c_tm = jnp.concatenate([init_state.astype(f32)[None, :, :], c_fc], axis=0)

    if batch_first:
        return jnp.transpose(m_tm, (1, 0, 2)), jnp.transpose(c_tm, (1, 0, 2))
    return m_tm, c_tm


def _reference_forward(init_state, xa, params, lstm_hidden):
    """Pure-JAX reference mirroring the PyTorch loop, for validation."""
    W_ih, W_hh, b_ih, b_hh, W_fc, b_fc = params
    B = init_state.shape[0]
    H = lstm_hidden
    h = jnp.zeros((B, H), jnp.float32)
    c = jnp.zeros((B, H), jnp.float32)
    ct = init_state
    ms, cs = [], [ct]
    for t in range(xa.shape[1]):
        x = jnp.concatenate([ct, xa[:, t]], axis=1)
        gates = x @ W_ih.T + b_ih + h @ W_hh.T + b_hh
        i, f, g, o = jnp.split(gates, 4, axis=1)
        c = jax.nn.sigmoid(f) * c + jax.nn.sigmoid(i) * jnp.tanh(g)
        h = jax.nn.sigmoid(o) * jnp.tanh(c)
        ct = c @ W_fc.T + b_fc
        ms.append(h)
        cs.append(ct)
    m = jnp.transpose(jnp.stack(ms), (1, 0, 2))
    cc = jnp.transpose(jnp.stack(cs), (1, 0, 2))
    return m, cc


def make_params(key, lstm_hidden):
    """Deterministic params matching nn.LSTMCell(11, H) + nn.Linear(H, 2)."""
    H = lstm_hidden
    bound = 1.0 / np.sqrt(H)
    ks = jax.random.split(key, 6)
    W_ih = jax.random.uniform(ks[0], (4 * H, 11), jnp.float32, -bound, bound)
    W_hh = jax.random.uniform(ks[1], (4 * H, H), jnp.float32, -bound, bound)
    b_ih = jax.random.uniform(ks[2], (4 * H,), jnp.float32, -bound, bound)
    b_hh = jax.random.uniform(ks[3], (4 * H,), jnp.float32, -bound, bound)
    W_fc = jax.random.uniform(ks[4], (2, H), jnp.float32, -bound, bound)
    b_fc = jax.random.uniform(ks[5], (2,), jnp.float32, -bound, bound)
    return W_ih, W_hh, b_ih, b_hh, W_fc, b_fc


if __name__ == "__main__":
    B, T, H = 2, 8, 32          # LSTM input = 2 (ct feedback) + 9 (xa) = 11
    key = jax.random.PRNGKey(0)
    k_p, k_s, k_x = jax.random.split(key, 3)

    params = make_params(k_p, H)
    init_state = jax.random.normal(k_s, (B, 2), jnp.float32)
    xa = jax.random.normal(k_x, (B, T, 9), jnp.float32)

    fwd = jax.jit(functools.partial(arlstm_forward, lstm_hidden=H,
                                    batch_first=True))
    m_out, c_out = fwd(init_state, xa, params)
    jax.block_until_ready((m_out, c_out))

    m_want, c_want = _reference_forward(init_state, xa, params, H)
    assert m_out.shape == (B, T, H) and c_out.shape == (B, T + 1, 2)
    np.testing.assert_allclose(np.asarray(m_out), np.asarray(m_want),
                               rtol=2e-4, atol=2e-4)
    np.testing.assert_allclose(np.asarray(c_out), np.asarray(c_want),
                               rtol=2e-4, atol=2e-4)
    print("KERNEL_OK")
</pallas_src>

<mosaic_0001>
module attributes {stable_mosaic.version = 11 : i64} {
  func.func @_arlstm_kernel(%arg0: i32, %arg1: i32, %arg2: memref<8x8x128xf32, #tpu.memory_space<vmem>>, %arg3: memref<64x128xf32, #tpu.memory_space<vmem>>, %arg4: memref<8x8x64xf32, #tpu.memory_space<vmem>>, %arg5: memref<8x64xf32, #tpu.memory_space<vmem>>) attributes {dimension_semantics = [#tpu.dimension_semantics<parallel>, #tpu.dimension_semantics<arbitrary>], iteration_bounds = array<i64: 1, 1>, scalar_prefetch = 0 : i64, scratch_operands = 1 : i64, tpu.core_type = #tpu.core_type<tc>, window_params = [{transform_indices = @transform_0, window_bounds = array<i64: 8, 8, 128>}, {pipeline_mode = #tpu.pipeline_mode<synchronous>, transform_indices = @transform_1, window_bounds = array<i64: 64, 128>}, {transform_indices = @transform_2, window_bounds = array<i64: 8, 8, 64>}]} {
    %c0_i32 = arith.constant 0 : i32
    %0 = arith.cmpi eq, %arg1, %c0_i32 : i32
    %1 = arith.extui %0 : i1 to i32
    %c0_i32_0 = arith.constant 0 : i32
    %2 = arith.cmpi ne, %1, %c0_i32_0 : i32
    scf.if %2 {
      %cst_62 = arith.constant 0.000000e+00 : f32
      %220 = vector.broadcast %cst_62 : f32 to vector<8x64xf32>
      %c0_63 = arith.constant 0 : index
      %c0_64 = arith.constant 0 : index
      %221 = vector.load %arg5[%c0_63, %c0_64] : memref<8x64xf32, #tpu.memory_space<vmem>>, vector<8x64xf32>
      tpu.vector_store %arg5[%c0_63, %c0_64], %220 {strides = array<i32>} : memref<8x64xf32, #tpu.memory_space<vmem>>, vector<8x64xf32>,
    } else {
    }
    %c0 = arith.constant 0 : index
    %c0_1 = arith.constant 0 : index
    %3 = vector.load %arg3[%c0, %c0_1] : memref<64x128xf32, #tpu.memory_space<vmem>>, vector<64x128xf32>
    %4 = tpu.iota {dimensions = array<i32: 1>} : vector<8x128xi32>
    %c64_i32 = arith.constant 64 : i32
    %5 = vector.broadcast %c64_i32 : i32 to vector<8x128xi32>
    %6 = arith.cmpi sge, %4, %5 : vector<8x128xi32>
    %c96_i32 = arith.constant 96 : i32
    %7 = vector.broadcast %c96_i32 : i32 to vector<8x128xi32>
    %8 = arith.cmpi slt, %4, %7 : vector<8x128xi32>
    %9 = arith.andi %6, %8 : vector<8x128xi1>
    %c0_2 = arith.constant 0 : index
    %c0_3 = arith.constant 0 : index
    %10 = vector.load %arg5[%c0_2, %c0_3] : memref<8x64xf32, #tpu.memory_space<vmem>>, vector<8x64xf32>
    %c0_i32_4 = arith.constant 0 : i32
    %11 = arith.index_cast %c0_i32_4 : i32 to index
    %c0_5 = arith.constant 0 : index
    %c0_6 = arith.constant 0 : index
    %12 = vector.load %arg2[%11, %c0_5, %c0_6] : memref<8x8x128xf32, #tpu.memory_space<vmem>>, vector<1x8x128xf32>
    %13 = vector.shape_cast %12 : vector<1x8x128xf32> to vector<8x128xf32>
    %cst = arith.constant dense<0.000000e+00> : vector<8x128xf32>
    %14 = tpu.matmul %10, %3, %cst {dimension_numbers = #tpu.dot_dimension_numbers<[1], [0], [0], [1], [0, 0, 1, 1], [], []>} : vector<8x64xf32>, vector<64x128xf32>, vector<8x128xf32> -> vector<8x128xf32>
    %15 = arith.addf %13, %14 : vector<8x128xf32>
    %16 = math.tanh %15 : vector<8x128xf32>
    %cst_7 = arith.constant 5.000000e-01 : f32
    %17 = vector.broadcast %cst_7 : f32 to vector<8x128xf32>
    %18 = arith.mulf %17, %16 : vector<8x128xf32>
    %cst_8 = arith.constant 5.000000e-01 : f32
    %19 = vector.broadcast %cst_8 : f32 to vector<8x128xf32>
    %20 = arith.addf %18, %19 : vector<8x128xf32>
    %21 = arith.select %9, %16, %20 : vector<8x128xi1>, vector<8x128xf32>
    %22 = vector.extract_strided_slice %21 {offsets = [0, 0], sizes = [8, 32], strides = [1, 1]} : vector<8x128xf32> to vector<8x32xf32>
    %23 = vector.extract_strided_slice %21 {offsets = [0, 32], sizes = [8, 32], strides = [1, 1]} : vector<8x128xf32> to vector<8x32xf32>
    %24 = vector.extract_strided_slice %21 {offsets = [0, 64], sizes = [8, 32], strides = [1, 1]} : vector<8x128xf32> to vector<8x32xf32>
    %25 = vector.extract_strided_slice %21 {offsets = [0, 96], sizes = [8, 32], strides = [1, 1]} : vector<8x128xf32> to vector<8x32xf32>
    %26 = vector.extract_strided_slice %10 {offsets = [0, 32], sizes = [8, 32], strides = [1, 1]} : vector<8x64xf32> to vector<8x32xf32>
    %27 = arith.mulf %23, %26 : vector<8x32xf32>
    %28 = arith.mulf %22, %24 : vector<8x32xf32>
    %29 = arith.addf %27, %28 : vector<8x32xf32>
    %30 = math.tanh %29 : vector<8x32xf32>
    %31 = arith.mulf %25, %30 : vector<8x32xf32>
    %32 = tpu.concatenate %31, %29 in 1 : vector<8x32xf32>, vector<8x32xf32> -> vector<8x64xf32>
    %33 = arith.index_cast %c0_i32_4 : i32 to index
    %c0_9 = arith.constant 0 : index
    %c0_10 = arith.constant 0 : index
    %34 = vector.load %arg4[%33, %c0_9, %c0_10] : memref<8x8x64xf32, #tpu.memory_space<vmem>>, vector<1x8x64xf32>
    %35 = vector.shape_cast %34 : vector<1x8x64xf32> to vector<8x64xf32>
    %36 = vector.shape_cast %32 : vector<8x64xf32> to vector<1x8x64xf32>
    tpu.vector_store %arg4[%33, %c0_9, %c0_10], %36 {strides = array<i32>} : memref<8x8x64xf32, #tpu.memory_space<vmem>>, vector<1x8x64xf32>,
    %c1_i32 = arith.constant 1 : i32
    %37 = arith.index_cast %c1_i32 : i32 to index
    %c0_11 = arith.constant 0 : index
    %c0_12 = arith.constant 0 : index
    %38 = vector.load %arg2[%37, %c0_11, %c0_12] : memref<8x8x128xf32, #tpu.memory_space<vmem>>, vector<1x8x128xf32>
    %39 = vector.shape_cast %38 : vector<1x8x128xf32> to vector<8x128xf32>
    %cst_13 = arith.constant dense<0.000000e+00> : vector<8x128xf32>
    %40 = tpu.matmul %32, %3, %cst_13 {dimension_numbers = #tpu.dot_dimension_numbers<[1], [0], [0], [1], [0, 0, 1, 1], [], []>} : vector<8x64xf32>, vector<64x128xf32>, vector<8x128xf32> -> vector<8x128xf32>
    %41 = arith.addf %39, %40 : vector<8x128xf32>
    %42 = math.tanh %41 : vector<8x128xf32>
    %cst_14 = arith.constant 5.000000e-01 : f32
    %43 = vector.broadcast %cst_14 : f32 to vector<8x128xf32>
    %44 = arith.mulf %43, %42 : vector<8x128xf32>
    %cst_15 = arith.constant 5.000000e-01 : f32
    %45 = vector.broadcast %cst_15 : f32 to vector<8x128xf32>
    %46 = arith.addf %44, %45 : vector<8x128xf32>
    %47 = arith.select %9, %42, %46 : vector<8x128xi1>, vector<8x128xf32>
    %48 = vector.extract_strided_slice %47 {offsets = [0, 0], sizes = [8, 32], strides = [1, 1]} : vector<8x128xf32> to vector<8x32xf32>
    %49 = vector.extract_strided_slice %47 {offsets = [0, 32], sizes = [8, 32], strides = [1, 1]} : vector<8x128xf32> to vector<8x32xf32>
    %50 = vector.extract_strided_slice %47 {offsets = [0, 64], sizes = [8, 32], strides = [1, 1]} : vector<8x128xf32> to vector<8x32xf32>
    %51 = vector.extract_strided_slice %47 {offsets = [0, 96], sizes = [8, 32], strides = [1, 1]} : vector<8x128xf32> to vector<8x32xf32>
    %52 = vector.extract_strided_slice %32 {offsets = [0, 32], sizes = [8, 32], strides = [1, 1]} : vector<8x64xf32> to vector<8x32xf32>
    %53 = arith.mulf %49, %52 : vector<8x32xf32>
    %54 = arith.mulf %48, %50 : vector<8x32xf32>
    %55 = arith.addf %53, %54 : vector<8x32xf32>
    %56 = math.tanh %55 : vector<8x32xf32>
    %57 = arith.mulf %51, %56 : vector<8x32xf32>
    %58 = tpu.concatenate %57, %55 in 1 : vector<8x32xf32>, vector<8x32xf32> -> vector<8x64xf32>
    %59 = arith.index_cast %c1_i32 : i32 to index
    %c0_16 = arith.constant 0 : index
    %c0_17 = arith.constant 0 : index
    %60 = vector.load %arg4[%59, %c0_16, %c0_17] : memref<8x8x64xf32, #tpu.memory_space<vmem>>, vector<1x8x64xf32>
    %61 = vector.shape_cast %60 : vector<1x8x64xf32> to vector<8x64xf32>
    %62 = vector.shape_cast %58 : vector<8x64xf32> to vector<1x8x64xf32>
    tpu.vector_store %arg4[%59, %c0_16, %c0_17], %62 {strides = array<i32>} : memref<8x8x64xf32, #tpu.memory_space<vmem>>, vector<1x8x64xf32>,
    %c2_i32 = arith.constant 2 : i32
    %63 = arith.index_cast %c2_i32 : i32 to index
    %c0_18 = arith.constant 0 : index
    %c0_19 = arith.constant 0 : index
    %64 = vector.load %arg2[%63, %c0_18, %c0_19] : memref<8x8x128xf32, #tpu.memory_space<vmem>>, vector<1x8x128xf32>
    %65 = vector.shape_cast %64 : vector<1x8x128xf32> to vector<8x128xf32>
    %cst_20 = arith.constant dense<0.000000e+00> : vector<8x128xf32>
    %66 = tpu.matmul %58, %3, %cst_20 {dimension_numbers = #tpu.dot_dimension_numbers<[1], [0], [0], [1], [0, 0, 1, 1], [], []>} : vector<8x64xf32>, vector<64x128xf32>, vector<8x128xf32> -> vector<8x128xf32>
    %67 = arith.addf %65, %66 : vector<8x128xf32>
    %68 = math.tanh %67 : vector<8x128xf32>
    %cst_21 = arith.constant 5.000000e-01 : f32
    %69 = vector.broadcast %cst_21 : f32 to vector<8x128xf32>
    %70 = arith.mulf %69, %68 : vector<8x128xf32>
    %cst_22 = arith.constant 5.000000e-01 : f32
    %71 = vector.broadcast %cst_22 : f32 to vector<8x128xf32>
    %72 = arith.addf %70, %71 : vector<8x128xf32>
    %73 = arith.select %9, %68, %72 : vector<8x128xi1>, vector<8x128xf32>
    %74 = vector.extract_strided_slice %73 {offsets = [0, 0], sizes = [8, 32], strides = [1, 1]} : vector<8x128xf32> to vector<8x32xf32>
    %75 = vector.extract_strided_slice %73 {offsets = [0, 32], sizes = [8, 32], strides = [1, 1]} : vector<8x128xf32> to vector<8x32xf32>
    %76 = vector.extract_strided_slice %73 {offsets = [0, 64], sizes = [8, 32], strides = [1, 1]} : vector<8x128xf32> to vector<8x32xf32>
    %77 = vector.extract_strided_slice %73 {offsets = [0, 96], sizes = [8, 32], strides = [1, 1]} : vector<8x128xf32> to vector<8x32xf32>
    %78 = vector.extract_strided_slice %58 {offsets = [0, 32], sizes = [8, 32], strides = [1, 1]} : vector<8x64xf32> to vector<8x32xf32>
    %79 = arith.mulf %75, %78 : vector<8x32xf32>
    %80 = arith.mulf %74, %76 : vector<8x32xf32>
    %81 = arith.addf %79, %80 : vector<8x32xf32>
    %82 = math.tanh %81 : vector<8x32xf32>
    %83 = arith.mulf %77, %82 : vector<8x32xf32>
    %84 = tpu.concatenate %83, %81 in 1 : vector<8x32xf32>, vector<8x32xf32> -> vector<8x64xf32>
    %85 = arith.index_cast %c2_i32 : i32 to index
    %c0_23 = arith.constant 0 : index
    %c0_24 = arith.constant 0 : index
    %86 = vector.load %arg4[%85, %c0_23, %c0_24] : memref<8x8x64xf32, #tpu.memory_space<vmem>>, vector<1x8x64xf32>
    %87 = vector.shape_cast %86 : vector<1x8x64xf32> to vector<8x64xf32>
    %88 = vector.shape_cast %84 : vector<8x64xf32> to vector<1x8x64xf32>
    tpu.vector_store %arg4[%85, %c0_23, %c0_24], %88 {strides = array<i32>} : memref<8x8x64xf32, #tpu.memory_space<vmem>>, vector<1x8x64xf32>,
    %c3_i32 = arith.constant 3 : i32
    %89 = arith.index_cast %c3_i32 : i32 to index
    %c0_25 = arith.constant 0 : index
    %c0_26 = arith.constant 0 : index
    %90 = vector.load %arg2[%89, %c0_25, %c0_26] : memref<8x8x128xf32, #tpu.memory_space<vmem>>, vector<1x8x128xf32>
    %91 = vector.shape_cast %90 : vector<1x8x128xf32> to vector<8x128xf32>
    %cst_27 = arith.constant dense<0.000000e+00> : vector<8x128xf32>
    %92 = tpu.matmul %84, %3, %cst_27 {dimension_numbers = #tpu.dot_dimension_numbers<[1], [0], [0], [1], [0, 0, 1, 1], [], []>} : vector<8x64xf32>, vector<64x128xf32>, vector<8x128xf32> -> vector<8x128xf32>
    %93 = arith.addf %91, %92 : vector<8x128xf32>
    %94 = math.tanh %93 : vector<8x128xf32>
    %cst_28 = arith.constant 5.000000e-01 : f32
    %95 = vector.broadcast %cst_28 : f32 to vector<8x128xf32>
    %96 = arith.mulf %95, %94 : vector<8x128xf32>
    %cst_29 = arith.constant 5.000000e-01 : f32
    %97 = vector.broadcast %cst_29 : f32 to vector<8x128xf32>
    %98 = arith.addf %96, %97 : vector<8x128xf32>
    %99 = arith.select %9, %94, %98 : vector<8x128xi1>, vector<8x128xf32>
    %100 = vector.extract_strided_slice %99 {offsets = [0, 0], sizes = [8, 32], strides = [1, 1]} : vector<8x128xf32> to vector<8x32xf32>
    %101 = vector.extract_strided_slice %99 {offsets = [0, 32], sizes = [8, 32], strides = [1, 1]} : vector<8x128xf32> to vector<8x32xf32>
    %102 = vector.extract_strided_slice %99 {offsets = [0, 64], sizes = [8, 32], strides = [1, 1]} : vector<8x128xf32> to vector<8x32xf32>
    %103 = vector.extract_strided_slice %99 {offsets = [0, 96], sizes = [8, 32], strides = [1, 1]} : vector<8x128xf32> to vector<8x32xf32>
    %104 = vector.extract_strided_slice %84 {offsets = [0, 32], sizes = [8, 32], strides = [1, 1]} : vector<8x64xf32> to vector<8x32xf32>
    %105 = arith.mulf %101, %104 : vector<8x32xf32>
    %106 = arith.mulf %100, %102 : vector<8x32xf32>
    %107 = arith.addf %105, %106 : vector<8x32xf32>
    %108 = math.tanh %107 : vector<8x32xf32>
    %109 = arith.mulf %103, %108 : vector<8x32xf32>
    %110 = tpu.concatenate %109, %107 in 1 : vector<8x32xf32>, vector<8x32xf32> -> vector<8x64xf32>
    %111 = arith.index_cast %c3_i32 : i32 to index
    %c0_30 = arith.constant 0 : index
    %c0_31 = arith.constant 0 : index
    %112 = vector.load %arg4[%111, %c0_30, %c0_31] : memref<8x8x64xf32, #tpu.memory_space<vmem>>, vector<1x8x64xf32>
    %113 = vector.shape_cast %112 : vector<1x8x64xf32> to vector<8x64xf32>
    %114 = vector.shape_cast %110 : vector<8x64xf32> to vector<1x8x64xf32>
    tpu.vector_store %arg4[%111, %c0_30, %c0_31], %114 {strides = array<i32>} : memref<8x8x64xf32, #tpu.memory_space<vmem>>, vector<1x8x64xf32>,
    %c4_i32 = arith.constant 4 : i32
    %115 = arith.index_cast %c4_i32 : i32 to index
    %c0_32 = arith.constant 0 : index
    %c0_33 = arith.constant 0 : index
    %116 = vector.load %arg2[%115, %c0_32, %c0_33] : memref<8x8x128xf32, #tpu.memory_space<vmem>>, vector<1x8x128xf32>
    %117 = vector.shape_cast %116 : vector<1x8x128xf32> to vector<8x128xf32>
    %cst_34 = arith.constant dense<0.000000e+00> : vector<8x128xf32>
    %118 = tpu.matmul %110, %3, %cst_34 {dimension_numbers = #tpu.dot_dimension_numbers<[1], [0], [0], [1], [0, 0, 1, 1], [], []>} : vector<8x64xf32>, vector<64x128xf32>, vector<8x128xf32> -> vector<8x128xf32>
    %119 = arith.addf %117, %118 : vector<8x128xf32>
    %120 = math.tanh %119 : vector<8x128xf32>
    %cst_35 = arith.constant 5.000000e-01 : f32
    %121 = vector.broadcast %cst_35 : f32 to vector<8x128xf32>
    %122 = arith.mulf %121, %120 : vector<8x128xf32>
    %cst_36 = arith.constant 5.000000e-01 : f32
    %123 = vector.broadcast %cst_36 : f32 to vector<8x128xf32>
    %124 = arith.addf %122, %123 : vector<8x128xf32>
    %125 = arith.select %9, %120, %124 : vector<8x128xi1>, vector<8x128xf32>
    %126 = vector.extract_strided_slice %125 {offsets = [0, 0], sizes = [8, 32], strides = [1, 1]} : vector<8x128xf32> to vector<8x32xf32>
    %127 = vector.extract_strided_slice %125 {offsets = [0, 32], sizes = [8, 32], strides = [1, 1]} : vector<8x128xf32> to vector<8x32xf32>
    %128 = vector.extract_strided_slice %125 {offsets = [0, 64], sizes = [8, 32], strides = [1, 1]} : vector<8x128xf32> to vector<8x32xf32>
    %129 = vector.extract_strided_slice %125 {offsets = [0, 96], sizes = [8, 32], strides = [1, 1]} : vector<8x128xf32> to vector<8x32xf32>
    %130 = vector.extract_strided_slice %110 {offsets = [0, 32], sizes = [8, 32], strides = [1, 1]} : vector<8x64xf32> to vector<8x32xf32>
    %131 = arith.mulf %127, %130 : vector<8x32xf32>
    %132 = arith.mulf %126, %128 : vector<8x32xf32>
    %133 = arith.addf %131, %132 : vector<8x32xf32>
    %134 = math.tanh %133 : vector<8x32xf32>
    %135 = arith.mulf %129, %134 : vector<8x32xf32>
    %136 = tpu.concatenate %135, %133 in 1 : vector<8x32xf32>, vector<8x32xf32> -> vector<8x64xf32>
    %137 = arith.index_cast %c4_i32 : i32 to index
    %c0_37 = arith.constant 0 : index
    %c0_38 = arith.constant 0 : index
    %138 = vector.load %arg4[%137, %c0_37, %c0_38] : memref<8x8x64xf32, #tpu.memory_space<vmem>>, vector<1x8x64xf32>
    %139 = vector.shape_cast %138 : vector<1x8x64xf32> to vector<8x64xf32>
    %140 = vector.shape_cast %136 : vector<8x64xf32> to vector<1x8x64xf32>
    tpu.vector_store %arg4[%137, %c0_37, %c0_38], %140 {strides = array<i32>} : memref<8x8x64xf32, #tpu.memory_space<vmem>>, vector<1x8x64xf32>,
    %c5_i32 = arith.constant 5 : i32
    %141 = arith.index_cast %c5_i32 : i32 to index
    %c0_39 = arith.constant 0 : index
    %c0_40 = arith.constant 0 : index
    %142 = vector.load %arg2[%141, %c0_39, %c0_40] : memref<8x8x128xf32, #tpu.memory_space<vmem>>, vector<1x8x128xf32>
    %143 = vector.shape_cast %142 : vector<1x8x128xf32> to vector<8x128xf32>
    %cst_41 = arith.constant dense<0.000000e+00> : vector<8x128xf32>
    %144 = tpu.matmul %136, %3, %cst_41 {dimension_numbers = #tpu.dot_dimension_numbers<[1], [0], [0], [1], [0, 0, 1, 1], [], []>} : vector<8x64xf32>, vector<64x128xf32>, vector<8x128xf32> -> vector<8x128xf32>
    %145 = arith.addf %143, %144 : vector<8x128xf32>
    %146 = math.tanh %145 : vector<8x128xf32>
    %cst_42 = arith.constant 5.000000e-01 : f32
    %147 = vector.broadcast %cst_42 : f32 to vector<8x128xf32>
    %148 = arith.mulf %147, %146 : vector<8x128xf32>
    %cst_43 = arith.constant 5.000000e-01 : f32
    %149 = vector.broadcast %cst_43 : f32 to vector<8x128xf32>
    %150 = arith.addf %148, %149 : vector<8x128xf32>
    %151 = arith.select %9, %146, %150 : vector<8x128xi1>, vector<8x128xf32>
    %152 = vector.extract_strided_slice %151 {offsets = [0, 0], sizes = [8, 32], strides = [1, 1]} : vector<8x128xf32> to vector<8x32xf32>
    %153 = vector.extract_strided_slice %151 {offsets = [0, 32], sizes = [8, 32], strides = [1, 1]} : vector<8x128xf32> to vector<8x32xf32>
    %154 = vector.extract_strided_slice %151 {offsets = [0, 64], sizes = [8, 32], strides = [1, 1]} : vector<8x128xf32> to vector<8x32xf32>
    %155 = vector.extract_strided_slice %151 {offsets = [0, 96], sizes = [8, 32], strides = [1, 1]} : vector<8x128xf32> to vector<8x32xf32>
    %156 = vector.extract_strided_slice %136 {offsets = [0, 32], sizes = [8, 32], strides = [1, 1]} : vector<8x64xf32> to vector<8x32xf32>
    %157 = arith.mulf %153, %156 : vector<8x32xf32>
    %158 = arith.mulf %152, %154 : vector<8x32xf32>
    %159 = arith.addf %157, %158 : vector<8x32xf32>
    %160 = math.tanh %159 : vector<8x32xf32>
    %161 = arith.mulf %155, %160 : vector<8x32xf32>
    %162 = tpu.concatenate %161, %159 in 1 : vector<8x32xf32>, vector<8x32xf32> -> vector<8x64xf32>
    %163 = arith.index_cast %c5_i32 : i32 to index
    %c0_44 = arith.constant 0 : index
    %c0_45 = arith.constant 0 : index
    %164 = vector.load %arg4[%163, %c0_44, %c0_45] : memref<8x8x64xf32, #tpu.memory_space<vmem>>, vector<1x8x64xf32>
    %165 = vector.shape_cast %164 : vector<1x8x64xf32> to vector<8x64xf32>
    %166 = vector.shape_cast %162 : vector<8x64xf32> to vector<1x8x64xf32>
    tpu.vector_store %arg4[%163, %c0_44, %c0_45], %166 {strides = array<i32>} : memref<8x8x64xf32, #tpu.memory_space<vmem>>, vector<1x8x64xf32>,
    %c6_i32 = arith.constant 6 : i32
    %167 = arith.index_cast %c6_i32 : i32 to index
    %c0_46 = arith.constant 0 : index
    %c0_47 = arith.constant 0 : index
    %168 = vector.load %arg2[%167, %c0_46, %c0_47] : memref<8x8x128xf32, #tpu.memory_space<vmem>>, vector<1x8x128xf32>
    %169 = vector.shape_cast %168 : vector<1x8x128xf32> to vector<8x128xf32>
    %cst_48 = arith.constant dense<0.000000e+00> : vector<8x128xf32>
    %170 = tpu.matmul %162, %3, %cst_48 {dimension_numbers = #tpu.dot_dimension_numbers<[1], [0], [0], [1], [0, 0, 1, 1], [], []>} : vector<8x64xf32>, vector<64x128xf32>, vector<8x128xf32> -> vector<8x128xf32>
    %171 = arith.addf %169, %170 : vector<8x128xf32>
    %172 = math.tanh %171 : vector<8x128xf32>
    %cst_49 = arith.constant 5.000000e-01 : f32
    %173 = vector.broadcast %cst_49 : f32 to vector<8x128xf32>
    %174 = arith.mulf %173, %172 : vector<8x128xf32>
    %cst_50 = arith.constant 5.000000e-01 : f32
    %175 = vector.broadcast %cst_50 : f32 to vector<8x128xf32>
    %176 = arith.addf %174, %175 : vector<8x128xf32>
    %177 = arith.select %9, %172, %176 : vector<8x128xi1>, vector<8x128xf32>
    %178 = vector.extract_strided_slice %177 {offsets = [0, 0], sizes = [8, 32], strides = [1, 1]} : vector<8x128xf32> to vector<8x32xf32>
    %179 = vector.extract_strided_slice %177 {offsets = [0, 32], sizes = [8, 32], strides = [1, 1]} : vector<8x128xf32> to vector<8x32xf32>
    %180 = vector.extract_strided_slice %177 {offsets = [0, 64], sizes = [8, 32], strides = [1, 1]} : vector<8x128xf32> to vector<8x32xf32>
    %181 = vector.extract_strided_slice %177 {offsets = [0, 96], sizes = [8, 32], strides = [1, 1]} : vector<8x128xf32> to vector<8x32xf32>
    %182 = vector.extract_strided_slice %162 {offsets = [0, 32], sizes = [8, 32], strides = [1, 1]} : vector<8x64xf32> to vector<8x32xf32>
    %183 = arith.mulf %179, %182 : vector<8x32xf32>
    %184 = arith.mulf %178, %180 : vector<8x32xf32>
    %185 = arith.addf %183, %184 : vector<8x32xf32>
    %186 = math.tanh %185 : vector<8x32xf32>
    %187 = arith.mulf %181, %186 : vector<8x32xf32>
    %188 = tpu.concatenate %187, %185 in 1 : vector<8x32xf32>, vector<8x32xf32> -> vector<8x64xf32>
    %189 = arith.index_cast %c6_i32 : i32 to index
    %c0_51 = arith.constant 0 : index
    %c0_52 = arith.constant 0 : index
    %190 = vector.load %arg4[%189, %c0_51, %c0_52] : memref<8x8x64xf32, #tpu.memory_space<vmem>>, vector<1x8x64xf32>
    %191 = vector.shape_cast %190 : vector<1x8x64xf32> to vector<8x64xf32>
    %192 = vector.shape_cast %188 : vector<8x64xf32> to vector<1x8x64xf32>
    tpu.vector_store %arg4[%189, %c0_51, %c0_52], %192 {strides = array<i32>} : memref<8x8x64xf32, #tpu.memory_space<vmem>>, vector<1x8x64xf32>,
    %c7_i32 = arith.constant 7 : i32
    %193 = arith.index_cast %c7_i32 : i32 to index
    %c0_53 = arith.constant 0 : index
    %c0_54 = arith.constant 0 : index
    %194 = vector.load %arg2[%193, %c0_53, %c0_54] : memref<8x8x128xf32, #tpu.memory_space<vmem>>, vector<1x8x128xf32>
    %195 = vector.shape_cast %194 : vector<1x8x128xf32> to vector<8x128xf32>
    %cst_55 = arith.constant dense<0.000000e+00> : vector<8x128xf32>
    %196 = tpu.matmul %188, %3, %cst_55 {dimension_numbers = #tpu.dot_dimension_numbers<[1], [0], [0], [1], [0, 0, 1, 1], [], []>} : vector<8x64xf32>, vector<64x128xf32>, vector<8x128xf32> -> vector<8x128xf32>
    %197 = arith.addf %195, %196 : vector<8x128xf32>
    %198 = math.tanh %197 : vector<8x128xf32>
    %cst_56 = arith.constant 5.000000e-01 : f32
    %199 = vector.broadcast %cst_56 : f32 to vector<8x128xf32>
    %200 = arith.mulf %199, %198 : vector<8x128xf32>
    %cst_57 = arith.constant 5.000000e-01 : f32
    %201 = vector.broadcast %cst_57 : f32 to vector<8x128xf32>
    %202 = arith.addf %200, %201 : vector<8x128xf32>
    %203 = arith.select %9, %198, %202 : vector<8x128xi1>, vector<8x128xf32>
    %204 = vector.extract_strided_slice %203 {offsets = [0, 0], sizes = [8, 32], strides = [1, 1]} : vector<8x128xf32> to vector<8x32xf32>
    %205 = vector.extract_strided_slice %203 {offsets = [0, 32], sizes = [8, 32], strides = [1, 1]} : vector<8x128xf32> to vector<8x32xf32>
    %206 = vector.extract_strided_slice %203 {offsets = [0, 64], sizes = [8, 32], strides = [1, 1]} : vector<8x128xf32> to vector<8x32xf32>
    %207 = vector.extract_strided_slice %203 {offsets = [0, 96], sizes = [8, 32], strides = [1, 1]} : vector<8x128xf32> to vector<8x32xf32>
    %208 = vector.extract_strided_slice %188 {offsets = [0, 32], sizes = [8, 32], strides = [1, 1]} : vector<8x64xf32> to vector<8x32xf32>
    %209 = arith.mulf %205, %208 : vector<8x32xf32>
    %210 = arith.mulf %204, %206 : vector<8x32xf32>
    %211 = arith.addf %209, %210 : vector<8x32xf32>
    %212 = math.tanh %211 : vector<8x32xf32>
    %213 = arith.mulf %207, %212 : vector<8x32xf32>
    %214 = tpu.concatenate %213, %211 in 1 : vector<8x32xf32>, vector<8x32xf32> -> vector<8x64xf32>
    %215 = arith.index_cast %c7_i32 : i32 to index
    %c0_58 = arith.constant 0 : index
    %c0_59 = arith.constant 0 : index
    %216 = vector.load %arg4[%215, %c0_58, %c0_59] : memref<8x8x64xf32, #tpu.memory_space<vmem>>, vector<1x8x64xf32>
    %217 = vector.shape_cast %216 : vector<1x8x64xf32> to vector<8x64xf32>
    %218 = vector.shape_cast %214 : vector<8x64xf32> to vector<1x8x64xf32>
    tpu.vector_store %arg4[%215, %c0_58, %c0_59], %218 {strides = array<i32>} : memref<8x8x64xf32, #tpu.memory_space<vmem>>, vector<1x8x64xf32>,
    %c8_i32 = arith.constant 8 : i32
    %c0_60 = arith.constant 0 : index
    %c0_61 = arith.constant 0 : index
    %219 = vector.load %arg5[%c0_60, %c0_61] : memref<8x64xf32, #tpu.memory_space<vmem>>, vector<8x64xf32>
    tpu.vector_store %arg5[%c0_60, %c0_61], %214 {strides = array<i32>} : memref<8x64xf32, #tpu.memory_space<vmem>>, vector<8x64xf32>,
    return
  }
  func.func @transform_0(%arg0: i32, %arg1: i32) -> (i32, i32, i32) {
    %c0_i32 = arith.constant 0 : i32
    %c0_i32_0 = arith.constant 0 : i32
    return %arg1, %arg0, %c0_i32 : i32, i32, i32
  }
  func.func @transform_1(%arg0: i32, %arg1: i32) -> (i32, i32) {
    %c0_i32 = arith.constant 0 : i32
    %c0_i32_0 = arith.constant 0 : i32
    %c0_i32_1 = arith.constant 0 : i32
    return %c0_i32, %c0_i32_0 : i32, i32
  }
  func.func @transform_2(%arg0: i32, %arg1: i32) -> (i32, i32, i32) {
    %c0_i32 = arith.constant 0 : i32
    %c0_i32_0 = arith.constant 0 : i32
    return %arg1, %arg0, %c0_i32 : i32, i32, i32
  }
}

</mosaic_0001>

<llo_original>
// kernel: arlstm_forward.1
$region0: #{arlstm_forward.1}
  #allocation0 [shape = 'u32[]', space=smem, size = 0x4, offset = 0x4, fixed_abs, tag = 'smem constant byte address 0x4 - core index']
  #allocation1 [shape = 'u32[144,128]{1,0:T(1,128)}', space=vmem, size = 0x12000, scoped, tag = 'internal scratch']
  #allocation2 [shape = 'f32[8,64]{1,0:T(8,128)}', space=vmem, size = 0x1000, scoped, tag = 'scratch operand']
  %s0 = inlined_call_operand.vmem [shape: f32[8,8,128], index: 0, kind: input, shape index: {}]
  %s1 = inlined_call_operand.vmem [shape: f32[64,128], index: 1, kind: input, shape index: {}]
  %s2 = inlined_call_operand.vmem [shape: f32[8,8,64], index: 2, kind: output, shape index: {}]
  %s3 = sld [smem:[#allocation0]]
  $region22: #{arlstm_forward.1} parent=0
    _
  %s5 = ssub.s32 1, %s3
  %s6 = scalar_select 0, %s5, %s3
  // Predicated region
  $region2: #{arlstm_forward.1} parent=0 // pred_check
    _
  $region3: #{arlstm_forward.1} parent=0 // pred_check_branch
    %8 = sbr.rel (0) target = $region5
  $region4: #{arlstm_forward.1} parent=0 // pred_region
    _
  $region5: #{arlstm_forward.1} parent=0 // pred_fallthru
    _
  // Predicated region
  $region6: #{arlstm_forward.1} parent=0 // pred_check
    _
  $region7: #{arlstm_forward.1} parent=0 // pred_check_branch
    %10 = sbr.rel (0) target = $region9
  $region8: #{arlstm_forward.1} parent=0 // pred_region
    _
  $region9: #{arlstm_forward.1} parent=0 // pred_fallthru
    _
  %p11 = scmp.eq.s32.totalorder 0, 0
  // Predicated region
  $region10: #{arlstm_forward.1} parent=0 // pred_check
    %p12 = pneg %p11
  $region11: #{arlstm_forward.1} parent=0 // pred_check_branch
    %14 = sbr.rel (%p12) target = $region13
  $region12: #{arlstm_forward.1} parent=0 // pred_region
    %vm15 = vcmask 523264
    %16 = vst.msk [vmem:[#allocation2] sm:$0xff] %vm15, 0.0
  $region13: #{arlstm_forward.1} parent=0 // pred_fallthru
    _
  %v17 = vld [vmem:[%s1] sm:$0xff]
  %v18 = vld [vmem:[%s1 + $0x8] sm:$0xff]
  %v19 = vld [vmem:[%s1 + $0x10] sm:$0xff]
  %v20 = vld [vmem:[%s1 + $0x18] sm:$0xff]
  %v21 = vld [vmem:[%s1 + $0x20] sm:$0xff]
  %v22 = vld [vmem:[%s1 + $0x28] sm:$0xff]
  %v23 = vld [vmem:[%s1 + $0x30] sm:$0xff]
  %v24 = vld [vmem:[%s1 + $0x38] sm:$0xff]
  %v25 = vlaneseq
  %v26 = vand.u32 %v25, 127
  %vm27 = vcmp.ge.s32.totalorder %v26, 64
  %vm28 = vcmp.lt.s32.totalorder %v26, 96
  %vm29 = vmand %vm27, %vm28
  %v30 = vld [vmem:[#allocation2] sm:$0xff]
  %v31 = vld [vmem:[%s0] sm:$0xff]
  %vm32 = vcmask 523264
  %v34 = vsel %vm32, %v30, 0
  %36 = vmatprep.subr.mxu0 0.0
  %37 = vmatpush1.msra.mxu0 %v17
  %38 = vmatprep.subr.mxu0 0.0
  %39 = vmatpush1.msra.mxu0 %v18
  %40 = vmatprep.subr.mxu0 0.0
  %41 = vmatpush1.msra.mxu0 %v19
  %42 = vmatprep.subr.mxu0 0.0
  %43 = vmatpush1.msra.mxu0 %v20
  %44 = vmatprep.subr.mxu0 0.0
  %45 = vmatpush1.msra.mxu0 %v21
  %46 = vmatprep.subr.mxu0 0.0
  %47 = vmatpush1.msra.mxu0 %v22
  %48 = vmatprep.subr.mxu0 0.0
  %49 = vmatpush1.msra.mxu0 %v23
  %50 = vmatprep.subr.mxu0 0.0
  %51 = vmatpush1.msra.mxu0 %v24
  %52 = vmatprep.subr.mxu0 0.0
  %53 = vmatpush1.msra.mxu0 0.0
  %54 = vmatprep.subr.mxu0 0.0
  %55 = vmatpush1.msra.mxu0 0.0
  %56 = vmatprep.subr.mxu0 0.0
  %57 = vmatpush1.msra.mxu0 0.0
  %58 = vmatprep.subr.mxu0 0.0
  %59 = vmatpush1.msra.mxu0 0.0
  %60 = vmatprep.subr.mxu0 0.0
  %61 = vmatpush1.msra.mxu0 0.0
  %62 = vmatprep.subr.mxu0 0.0
  %63 = vmatpush1.msra.mxu0 0.0
  %64 = vmatprep.subr.mxu0 0.0
  %65 = vmatpush1.msra.mxu0 0.0
  %66 = vmatprep.subr.mxu0 0.0
  %67 = vmatpush1.msra.mxu0 0.0
  %68 = vmatprep.subr.mxu0 0.0
  %69 = vmatpush1.msra.mxu0 0.0
  %70 = vmatprep.subr.mxu0 0.0
  %71 = vmatpush1.msra.mxu0 0.0
  %72 = vmatprep.subr.mxu0 0.0
  %73 = vmatpush1.msra.mxu0 0.0
  %74 = vmatprep.subr.mxu0 0.0
  %75 = vmatpush1.msra.mxu0 0.0
  %76 = vmatprep.subr.mxu0 0.0
  %77 = vmatpush1.msra.mxu0 0.0
  %78 = vmatprep.subr.mxu0 0.0
  %79 = vmatpush1.msra.mxu0 0.0
  %80 = vmatprep.subr.mxu0 0.0
  %81 = vmatpush1.msra.mxu0 0.0
  %82 = vmatprep.subr.mxu0 0.0
  %83 = vmatpush1.msra.mxu0 0.0
  %84 = vmatprep.subr.mxu0 0.0
  %85 = vmatpush1.msra.mxu0 0.0
  %86 = vmatprep.subr.mxu0 0.0
  %87 = vmatpush1.msra.mxu0 0.0
  %88 = vmatprep.subr.mxu0 0.0
  %89 = vmatpush1.msra.mxu0 0.0
  %90 = vmatprep.subr.mxu0 0.0
  %91 = vmatpush1.msra.mxu0 0.0
  %92 = vmatprep.subr.mxu0 0.0
  %93 = vmatpush1.msra.mxu0 0.0
  %94 = vmatprep.subr.mxu0 0.0
  %95 = vmatpush1.msra.mxu0 0.0
  %96 = vmatprep.subr.mxu0 0.0
  %97 = vmatpush1.msra.mxu0 0.0
  %98 = vmatprep.subr.mxu0 0.0
  %99 = vmatpush1.msra.mxu0 0.0
  %100 = vmatprep.mubr.f32.mxu0 0.0
  %101 = vmatmul.mubr.f32.gmra.mrb[0].mxu0 %v34
  %v102 = vpop.f32.mrb[0].mxu0
  %v103 = vadd.f32 0.0, %v102
  %v104 = vpop.f32.mrb[0].mxu0
  %105 = vdwg.mxu0
  %v106 = vadd.f32 %v31, %v103
  %v107 = vtanh.pop %v106
  %v108 = vmul.f32 %v107, 0.5
  %v109 = vadd.f32 %v108, 0.5
  %v110 = vsel %vm29, %v107, %v109
  %v111 = vmul.f32 %v110, %v30
  %113 = vrot.lane.b32.xlu0 %v110, 64
  %v114 = vpop.permute.xlu0 %113
  %v116 = vmul.f32 %v110, %v114
  %118 = vrot.lane.b32.xlu0 %v116, 32
  %v119 = vpop.permute.xlu0 %118
  %v121 = vadd.f32 %v111, %v119
  %v122 = vtanh.pop %v121
  %124 = vrot.lane.b32.xlu0 %v122, 64
  %v125 = vpop.permute.xlu0 %124
  %v127 = vmul.f32 %v110, %v125
  %129 = vrot.lane.b32.xlu0 %v127, 32
  %v130 = vpop.permute.xlu0 %129
  %vm132 = vcmask 261120
  %v133 = vsel %vm132, %v130, %v121
  %134 = vst.msk [vmem:[%s2] sm:$0xff] %vm32, %v133
  %s135 = scalar_lea.vmem %s0, 8
  %v136 = vld [vmem:[%s135] sm:$0xff]
  %v138 = vsel %vm32, %v133, 0
  %140 = vmatprep.subr.mxu0 0.0
  %141 = vmatpush1.msra.mxu0 %v17
  %142 = vmatprep.subr.mxu0 0.0
  %143 = vmatpush1.msra.mxu0 %v18
  %144 = vmatprep.subr.mxu0 0.0
  %145 = vmatpush1.msra.mxu0 %v19
  %146 = vmatprep.subr.mxu0 0.0
  %147 = vmatpush1.msra.mxu0 %v20
  %148 = vmatprep.subr.mxu0 0.0
  %149 = vmatpush1.msra.mxu0 %v21
  %150 = vmatprep.subr.mxu0 0.0
  %151 = vmatpush1.msra.mxu0 %v22
  %152 = vmatprep.subr.mxu0 0.0
  %153 = vmatpush1.msra.mxu0 %v23
  %154 = vmatprep.subr.mxu0 0.0
  %155 = vmatpush1.msra.mxu0 %v24
  %156 = vmatprep.subr.mxu0 0.0
  %157 = vmatpush1.msra.mxu0 0.0
  %158 = vmatprep.subr.mxu0 0.0
  %159 = vmatpush1.msra.mxu0 0.0
  %160 = vmatprep.subr.mxu0 0.0
  %161 = vmatpush1.msra.mxu0 0.0
  %162 = vmatprep.subr.mxu0 0.0
  %163 = vmatpush1.msra.mxu0 0.0
  %164 = vmatprep.subr.mxu0 0.0
  %165 = vmatpush1.msra.mxu0 0.0
  %166 = vmatprep.subr.mxu0 0.0
  %167 = vmatpush1.msra.mxu0 0.0
  %168 = vmatprep.subr.mxu0 0.0
  %169 = vmatpush1.msra.mxu0 0.0
  %170 = vmatprep.subr.mxu0 0.0
  %171 = vmatpush1.msra.mxu0 0.0
  %172 = vmatprep.subr.mxu0 0.0
  %173 = vmatpush1.msra.mxu0 0.0
  %174 = vmatprep.subr.mxu0 0.0
  %175 = vmatpush1.msra.mxu0 0.0
  %176 = vmatprep.subr.mxu0 0.0
  %177 = vmatpush1.msra.mxu0 0.0
  %178 = vmatprep.subr.mxu0 0.0
  %179 = vmatpush1.msra.mxu0 0.0
  %180 = vmatprep.subr.mxu0 0.0
  %181 = vmatpush1.msra.mxu0 0.0
  %182 = vmatprep.subr.mxu0 0.0
  %183 = vmatpush1.msra.mxu0 0.0
  %184 = vmatprep.subr.mxu0 0.0
  %185 = vmatpush1.msra.mxu0 0.0
  %186 = vmatprep.subr.mxu0 0.0
  %187 = vmatpush1.msra.mxu0 0.0
  %188 = vmatprep.subr.mxu0 0.0
  %189 = vmatpush1.msra.mxu0 0.0
  %190 = vmatprep.subr.mxu0 0.0
  %191 = vmatpush1.msra.mxu0 0.0
  %192 = vmatprep.subr.mxu0 0.0
  %193 = vmatpush1.msra.mxu0 0.0
  %194 = vmatprep.subr.mxu0 0.0
  %195 = vmatpush1.msra.mxu0 0.0
  %196 = vmatprep.subr.mxu0 0.0
  %197 = vmatpush1.msra.mxu0 0.0
  %198 = vmatprep.subr.mxu0 0.0
  %199 = vmatpush1.msra.mxu0 0.0
  %200 = vmatprep.subr.mxu0 0.0
  %201 = vmatpush1.msra.mxu0 0.0
  %202 = vmatprep.subr.mxu0 0.0
  %203 = vmatpush1.msra.mxu0 0.0
  %204 = vmatprep.mubr.f32.mxu0 0.0
  %205 = vmatmul.mubr.f32.gmra.mrb[0].mxu0 %v138
  %v206 = vpop.f32.mrb[0].mxu0
  %v207 = vadd.f32 0.0, %v206
  %v208 = vpop.f32.mrb[0].mxu0
  %209 = vdwg.mxu0
  %v210 = vadd.f32 %v136, %v207
  %v211 = vtanh.pop %v210
  %v212 = vmul.f32 %v211, 0.5
  %v213 = vadd.f32 %v212, 0.5
  %v214 = vsel %vm29, %v211, %v213
  %v215 = vmul.f32 %v214, %v133
  %217 = vrot.lane.b32.xlu0 %v214, 64
  %v218 = vpop.permute.xlu0 %217
  %v220 = vmul.f32 %v214, %v218
  %222 = vrot.lane.b32.xlu0 %v220, 32
  %v223 = vpop.permute.xlu0 %222
  %v225 = vadd.f32 %v215, %v223
  %v226 = vtanh.pop %v225
  %228 = vrot.lane.b32.xlu0 %v226, 64
  %v229 = vpop.permute.xlu0 %228
  %v231 = vmul.f32 %v214, %v229
  %233 = vrot.lane.b32.xlu0 %v231, 32
  %v234 = vpop.permute.xlu0 %233
  %v236 = vsel %vm132, %v234, %v225
  %s237 = scalar_lea.vmem %s2, 8
  %238 = vst.msk [vmem:[%s237] sm:$0xff] %vm32, %v236
  %s239 = scalar_lea.vmem %s0, 16
  %v240 = vld [vmem:[%s239] sm:$0xff]
  %v242 = vsel %vm32, %v236, 0
  %244 = vmatprep.subr.mxu0 0.0
  %245 = vmatpush1.msra.mxu0 %v17
  %246 = vmatprep.subr.mxu0 0.0
  %247 = vmatpush1.msra.mxu0 %v18
  %248 = vmatprep.subr.mxu0 0.0
  %249 = vmatpush1.msra.mxu0 %v19
  %250 = vmatprep.subr.mxu0 0.0
  %251 = vmatpush1.msra.mxu0 %v20
  %252 = vmatprep.subr.mxu0 0.0
  %253 = vmatpush1.msra.mxu0 %v21
  %254 = vmatprep.subr.mxu0 0.0
  %255 = vmatpush1.msra.mxu0 %v22
  %256 = vmatprep.subr.mxu0 0.0
  %257 = vmatpush1.msra.mxu0 %v23
  %258 = vmatprep.subr.mxu0 0.0
  %259 = vmatpush1.msra.mxu0 %v24
  %260 = vmatprep.subr.mxu0 0.0
  %261 = vmatpush1.msra.mxu0 0.0
  %262 = vmatprep.subr.mxu0 0.0
  %263 = vmatpush1.msra.mxu0 0.0
  %264 = vmatprep.subr.mxu0 0.0
  %265 = vmatpush1.msra.mxu0 0.0
  %266 = vmatprep.subr.mxu0 0.0
  %267 = vmatpush1.msra.mxu0 0.0
  %268 = vmatprep.subr.mxu0 0.0
  %269 = vmatpush1.msra.mxu0 0.0
  %270 = vmatprep.subr.mxu0 0.0
  %271 = vmatpush1.msra.mxu0 0.0
  %272 = vmatprep.subr.mxu0 0.0
  %273 = vmatpush1.msra.mxu0 0.0
  %274 = vmatprep.subr.mxu0 0.0
  %275 = vmatpush1.msra.mxu0 0.0
  %276 = vmatprep.subr.mxu0 0.0
  %277 = vmatpush1.msra.mxu0 0.0
  %278 = vmatprep.subr.mxu0 0.0
  %279 = vmatpush1.msra.mxu0 0.0
  %280 = vmatprep.subr.mxu0 0.0
  %281 = vmatpush1.msra.mxu0 0.0
  %282 = vmatprep.subr.mxu0 0.0
  %283 = vmatpush1.msra.mxu0 0.0
  %284 = vmatprep.subr.mxu0 0.0
  %285 = vmatpush1.msra.mxu0 0.0
  %286 = vmatprep.subr.mxu0 0.0
  %287 = vmatpush1.msra.mxu0 0.0
  %288 = vmatprep.subr.mxu0 0.0
  %289 = vmatpush1.msra.mxu0 0.0
  %290 = vmatprep.subr.mxu0 0.0
  %291 = vmatpush1.msra.mxu0 0.0
  %292 = vmatprep.subr.mxu0 0.0
  %293 = vmatpush1.msra.mxu0 0.0
  %294 = vmatprep.subr.mxu0 0.0
  %295 = vmatpush1.msra.mxu0 0.0
  %296 = vmatprep.subr.mxu0 0.0
  %297 = vmatpush1.msra.mxu0 0.0
  %298 = vmatprep.subr.mxu0 0.0
  %299 = vmatpush1.msra.mxu0 0.0
  %300 = vmatprep.subr.mxu0 0.0
  %301 = vmatpush1.msra.mxu0 0.0
  %302 = vmatprep.subr.mxu0 0.0
  %303 = vmatpush1.msra.mxu0 0.0
  %304 = vmatprep.subr.mxu0 0.0
  %305 = vmatpush1.msra.mxu0 0.0
  %306 = vmatprep.subr.mxu0 0.0
  %307 = vmatpush1.msra.mxu0 0.0
  %308 = vmatprep.mubr.f32.mxu0 0.0
  %309 = vmatmul.mubr.f32.gmra.mrb[0].mxu0 %v242
  %v310 = vpop.f32.mrb[0].mxu0
  %v311 = vadd.f32 0.0, %v310
  %v312 = vpop.f32.mrb[0].mxu0
  %313 = vdwg.mxu0
  %v314 = vadd.f32 %v240, %v311
  %v315 = vtanh.pop %v314
  %v316 = vmul.f32 %v315, 0.5
  %v317 = vadd.f32 %v316, 0.5
  %v318 = vsel %vm29, %v315, %v317
  %v319 = vmul.f32 %v318, %v236
  %321 = vrot.lane.b32.xlu0 %v318, 64
  %v322 = vpop.permute.xlu0 %321
  %v324 = vmul.f32 %v318, %v322
  %326 = vrot.lane.b32.xlu0 %v324, 32
  %v327 = vpop.permute.xlu0 %326
  %v329 = vadd.f32 %v319, %v327
  %v330 = vtanh.pop %v329
  %332 = vrot.lane.b32.xlu0 %v330, 64
  %v333 = vpop.permute.xlu0 %332
  %v335 = vmul.f32 %v318, %v333
  %337 = vrot.lane.b32.xlu0 %v335, 32
  %v338 = vpop.permute.xlu0 %337
  %v340 = vsel %vm132, %v338, %v329
  %s341 = scalar_lea.vmem %s2, 16
  %342 = vst.msk [vmem:[%s341] sm:$0xff] %vm32, %v340
  %s343 = scalar_lea.vmem %s0, 24
  %v344 = vld [vmem:[%s343] sm:$0xff]
  %v346 = vsel %vm32, %v340, 0
  %348 = vmatprep.subr.mxu0 0.0
  %349 = vmatpush1.msra.mxu0 %v17
  %350 = vmatprep.subr.mxu0 0.0
  %351 = vmatpush1.msra.mxu0 %v18
  %352 = vmatprep.subr.mxu0 0.0
  %353 = vmatpush1.msra.mxu0 %v19
  %354 = vmatprep.subr.mxu0 0.0
  %355 = vmatpush1.msra.mxu0 %v20
  %356 = vmatprep.subr.mxu0 0.0
  %357 = vmatpush1.msra.mxu0 %v21
  %358 = vmatprep.subr.mxu0 0.0
  %359 = vmatpush1.msra.mxu0 %v22
  %360 = vmatprep.subr.mxu0 0.0
  %361 = vmatpush1.msra.mxu0 %v23
  %362 = vmatprep.subr.mxu0 0.0
  %363 = vmatpush1.msra.mxu0 %v24
  %364 = vmatprep.subr.mxu0 0.0
  %365 = vmatpush1.msra.mxu0 0.0
  %366 = vmatprep.subr.mxu0 0.0
  %367 = vmatpush1.msra.mxu0 0.0
  %368 = vmatprep.subr.mxu0 0.0
  %369 = vmatpush1.msra.mxu0 0.0
  %370 = vmatprep.subr.mxu0 0.0
  %371 = vmatpush1.msra.mxu0 0.0
  %372 = vmatprep.subr.mxu0 0.0
  %373 = vmatpush1.msra.mxu0 0.0
  %374 = vmatprep.subr.mxu0 0.0
  %375 = vmatpush1.msra.mxu0 0.0
  %376 = vmatprep.subr.mxu0 0.0
  %377 = vmatpush1.msra.mxu0 0.0
  %378 = vmatprep.subr.mxu0 0.0
  %379 = vmatpush1.msra.mxu0 0.0
  %380 = vmatprep.subr.mxu0 0.0
  %381 = vmatpush1.msra.mxu0 0.0
  %382 = vmatprep.subr.mxu0 0.0
  %383 = vmatpush1.msra.mxu0 0.0
  %384 = vmatprep.subr.mxu0 0.0
  %385 = vmatpush1.msra.mxu0 0.0
  %386 = vmatprep.subr.mxu0 0.0
  %387 = vmatpush1.msra.mxu0 0.0
  %388 = vmatprep.subr.mxu0 0.0
  %389 = vmatpush1.msra.mxu0 0.0
  %390 = vmatprep.subr.mxu0 0.0
  %391 = vmatpush1.msra.mxu0 0.0
  %392 = vmatprep.subr.mxu0 0.0
  %393 = vmatpush1.msra.mxu0 0.0
  %394 = vmatprep.subr.mxu0 0.0
  %395 = vmatpush1.msra.mxu0 0.0
  %396 = vmatprep.subr.mxu0 0.0
  %397 = vmatpush1.msra.mxu0 0.0
  %398 = vmatprep.subr.mxu0 0.0
  %399 = vmatpush1.msra.mxu0 0.0
  %400 = vmatprep.subr.mxu0 0.0
  %401 = vmatpush1.msra.mxu0 0.0
  %402 = vmatprep.subr.mxu0 0.0
  %403 = vmatpush1.msra.mxu0 0.0
  %404 = vmatprep.subr.mxu0 0.0
  %405 = vmatpush1.msra.mxu0 0.0
  %406 = vmatprep.subr.mxu0 0.0
  %407 = vmatpush1.msra.mxu0 0.0
  %408 = vmatprep.subr.mxu0 0.0
  %409 = vmatpush1.msra.mxu0 0.0
  %410 = vmatprep.subr.mxu0 0.0
  %411 = vmatpush1.msra.mxu0 0.0
  %412 = vmatprep.mubr.f32.mxu0 0.0
  %413 = vmatmul.mubr.f32.gmra.mrb[0].mxu0 %v346
  %v414 = vpop.f32.mrb[0].mxu0
  %v415 = vadd.f32 0.0, %v414
  %v416 = vpop.f32.mrb[0].mxu0
  %417 = vdwg.mxu0
  %v418 = vadd.f32 %v344, %v415
  %v419 = vtanh.pop %v418
  %v420 = vmul.f32 %v419, 0.5
  %v421 = vadd.f32 %v420, 0.5
  %v422 = vsel %vm29, %v419, %v421
  %v423 = vmul.f32 %v422, %v340
  %425 = vrot.lane.b32.xlu0 %v422, 64
  %v426 = vpop.permute.xlu0 %425
  %v428 = vmul.f32 %v422, %v426
  %430 = vrot.lane.b32.xlu0 %v428, 32
  %v431 = vpop.permute.xlu0 %430
  %v433 = vadd.f32 %v423, %v431
  %v434 = vtanh.pop %v433
  %436 = vrot.lane.b32.xlu0 %v434, 64
  %v437 = vpop.permute.xlu0 %436
  %v439 = vmul.f32 %v422, %v437
  %441 = vrot.lane.b32.xlu0 %v439, 32
  %v442 = vpop.permute.xlu0 %441
  %v444 = vsel %vm132, %v442, %v433
  %s445 = scalar_lea.vmem %s2, 24
  %446 = vst.msk [vmem:[%s445] sm:$0xff] %vm32, %v444
  %s447 = scalar_lea.vmem %s0, 32
  %v448 = vld [vmem:[%s447] sm:$0xff]
  %v450 = vsel %vm32, %v444, 0
  %452 = vmatprep.subr.mxu0 0.0
  %453 = vmatpush1.msra.mxu0 %v17
  %454 = vmatprep.subr.mxu0 0.0
  %455 = vmatpush1.msra.mxu0 %v18
  %456 = vmatprep.subr.mxu0 0.0
  %457 = vmatpush1.msra.mxu0 %v19
  %458 = vmatprep.subr.mxu0 0.0
  %459 = vmatpush1.msra.mxu0 %v20
  %460 = vmatprep.subr.mxu0 0.0
  %461 = vmatpush1.msra.mxu0 %v21
  %462 = vmatprep.subr.mxu0 0.0
  %463 = vmatpush1.msra.mxu0 %v22
  %464 = vmatprep.subr.mxu0 0.0
  %465 = vmatpush1.msra.mxu0 %v23
  %466 = vmatprep.subr.mxu0 0.0
  %467 = vmatpush1.msra.mxu0 %v24
  %468 = vmatprep.subr.mxu0 0.0
  %469 = vmatpush1.msra.mxu0 0.0
  %470 = vmatprep.subr.mxu0 0.0
  %471 = vmatpush1.msra.mxu0 0.0
  %472 = vmatprep.subr.mxu0 0.0
  %473 = vmatpush1.msra.mxu0 0.0
  %474 = vmatprep.subr.mxu0 0.0
  %475 = vmatpush1.msra.mxu0 0.0
  %476 = vmatprep.subr.mxu0 0.0
  %477 = vmatpush1.msra.mxu0 0.0
  %478 = vmatprep.subr.mxu0 0.0
  %479 = vmatpush1.msra.mxu0 0.0
  %480 = vmatprep.subr.mxu0 0.0
  %481 = vmatpush1.msra.mxu0 0.0
  %482 = vmatprep.subr.mxu0 0.0
  %483 = vmatpush1.msra.mxu0 0.0
  %484 = vmatprep.subr.mxu0 0.0
  %485 = vmatpush1.msra.mxu0 0.0
  %486 = vmatprep.subr.mxu0 0.0
  %487 = vmatpush1.msra.mxu0 0.0
  %488 = vmatprep.subr.mxu0 0.0
  %489 = vmatpush1.msra.mxu0 0.0
  %490 = vmatprep.subr.mxu0 0.0
  %491 = vmatpush1.msra.mxu0 0.0
  %492 = vmatprep.subr.mxu0 0.0
  %493 = vmatpush1.msra.mxu0 0.0
  %494 = vmatprep.subr.mxu0 0.0
  %495 = vmatpush1.msra.mxu0 0.0
  %496 = vmatprep.subr.mxu0 0.0
  %497 = vmatpush1.msra.mxu0 0.0
  %498 = vmatprep.subr.mxu0 0.0
  %499 = vmatpush1.msra.mxu0 0.0
  %500 = vmatprep.subr.mxu0 0.0
  %501 = vmatpush1.msra.mxu0 0.0
  %502 = vmatprep.subr.mxu0 0.0
  %503 = vmatpush1.msra.mxu0 0.0
  %504 = vmatprep.subr.mxu0 0.0
  %505 = vmatpush1.msra.mxu0 0.0
  %506 = vmatprep.subr.mxu0 0.0
  %507 = vmatpush1.msra.mxu0 0.0
  %508 = vmatprep.subr.mxu0 0.0
  %509 = vmatpush1.msra.mxu0 0.0
  %510 = vmatprep.subr.mxu0 0.0
  %511 = vmatpush1.msra.mxu0 0.0
  %512 = vmatprep.subr.mxu0 0.0
  %513 = vmatpush1.msra.mxu0 0.0
  %514 = vmatprep.subr.mxu0 0.0
  %515 = vmatpush1.msra.mxu0 0.0
  %516 = vmatprep.mubr.f32.mxu0 0.0
  %517 = vmatmul.mubr.f32.gmra.mrb[0].mxu0 %v450
  %v518 = vpop.f32.mrb[0].mxu0
  %v519 = vadd.f32 0.0, %v518
  %v520 = vpop.f32.mrb[0].mxu0
  %521 = vdwg.mxu0
  %v522 = vadd.f32 %v448, %v519
  %v523 = vtanh.pop %v522
  %v524 = vmul.f32 %v523, 0.5
  %v525 = vadd.f32 %v524, 0.5
  %v526 = vsel %vm29, %v523, %v525
  %v527 = vmul.f32 %v526, %v444
  %529 = vrot.lane.b32.xlu0 %v526, 64
  %v530 = vpop.permute.xlu0 %529
  %v532 = vmul.f32 %v526, %v530
  %534 = vrot.lane.b32.xlu0 %v532, 32
  %v535 = vpop.permute.xlu0 %534
  %v537 = vadd.f32 %v527, %v535
  %v538 = vtanh.pop %v537
  %540 = vrot.lane.b32.xlu0 %v538, 64
  %v541 = vpop.permute.xlu0 %540
  %v543 = vmul.f32 %v526, %v541
  %545 = vrot.lane.b32.xlu0 %v543, 32
  %v546 = vpop.permute.xlu0 %545
  %v548 = vsel %vm132, %v546, %v537
  %s549 = scalar_lea.vmem %s2, 32
  %550 = vst.msk [vmem:[%s549] sm:$0xff] %vm32, %v548
  %s551 = scalar_lea.vmem %s0, 40
  %v552 = vld [vmem:[%s551] sm:$0xff]
  %v554 = vsel %vm32, %v548, 0
  %556 = vmatprep.subr.mxu0 0.0
  %557 = vmatpush1.msra.mxu0 %v17
  %558 = vmatprep.subr.mxu0 0.0
  %559 = vmatpush1.msra.mxu0 %v18
  %560 = vmatprep.subr.mxu0 0.0
  %561 = vmatpush1.msra.mxu0 %v19
  %562 = vmatprep.subr.mxu0 0.0
  %563 = vmatpush1.msra.mxu0 %v20
  %564 = vmatprep.subr.mxu0 0.0
  %565 = vmatpush1.msra.mxu0 %v21
  %566 = vmatprep.subr.mxu0 0.0
  %567 = vmatpush1.msra.mxu0 %v22
  %568 = vmatprep.subr.mxu0 0.0
  %569 = vmatpush1.msra.mxu0 %v23
  %570 = vmatprep.subr.mxu0 0.0
  %571 = vmatpush1.msra.mxu0 %v24
  %572 = vmatprep.subr.mxu0 0.0
  %573 = vmatpush1.msra.mxu0 0.0
  %574 = vmatprep.subr.mxu0 0.0
  %575 = vmatpush1.msra.mxu0 0.0
  %576 = vmatprep.subr.mxu0 0.0
  %577 = vmatpush1.msra.mxu0 0.0
  %578 = vmatprep.subr.mxu0 0.0
  %579 = vmatpush1.msra.mxu0 0.0
  %580 = vmatprep.subr.mxu0 0.0
  %581 = vmatpush1.msra.mxu0 0.0
  %582 = vmatprep.subr.mxu0 0.0
  %583 = vmatpush1.msra.mxu0 0.0
  %584 = vmatprep.subr.mxu0 0.0
  %585 = vmatpush1.msra.mxu0 0.0
  %586 = vmatprep.subr.mxu0 0.0
  %587 = vmatpush1.msra.mxu0 0.0
  %588 = vmatprep.subr.mxu0 0.0
  %589 = vmatpush1.msra.mxu0 0.0
  %590 = vmatprep.subr.mxu0 0.0
  %591 = vmatpush1.msra.mxu0 0.0
  %592 = vmatprep.subr.mxu0 0.0
  %593 = vmatpush1.msra.mxu0 0.0
  %594 = vmatprep.subr.mxu0 0.0
  %595 = vmatpush1.msra.mxu0 0.0
  %596 = vmatprep.subr.mxu0 0.0
  %597 = vmatpush1.msra.mxu0 0.0
  %598 = vmatprep.subr.mxu0 0.0
  %599 = vmatpush1.msra.mxu0 0.0
  %600 = vmatprep.subr.mxu0 0.0
  %601 = vmatpush1.msra.mxu0 0.0
  %602 = vmatprep.subr.mxu0 0.0
  %603 = vmatpush1.msra.mxu0 0.0
  %604 = vmatprep.subr.mxu0 0.0
  %605 = vmatpush1.msra.mxu0 0.0
  %606 = vmatprep.subr.mxu0 0.0
  %607 = vmatpush1.msra.mxu0 0.0
  %608 = vmatprep.subr.mxu0 0.0
  %609 = vmatpush1.msra.mxu0 0.0
  %610 = vmatprep.subr.mxu0 0.0
  %611 = vmatpush1.msra.mxu0 0.0
  %612 = vmatprep.subr.mxu0 0.0
  %613 = vmatpush1.msra.mxu0 0.0
  %614 = vmatprep.subr.mxu0 0.0
  %615 = vmatpush1.msra.mxu0 0.0
  %616 = vmatprep.subr.mxu0 0.0
  %617 = vmatpush1.msra.mxu0 0.0
  %618 = vmatprep.subr.mxu0 0.0
  %619 = vmatpush1.msra.mxu0 0.0
  %620 = vmatprep.mubr.f32.mxu0 0.0
  %621 = vmatmul.mubr.f32.gmra.mrb[0].mxu0 %v554
  %v622 = vpop.f32.mrb[0].mxu0
  %v623 = vadd.f32 0.0, %v622
  %v624 = vpop.f32.mrb[0].mxu0
  %625 = vdwg.mxu0
  %v626 = vadd.f32 %v552, %v623
  %v627 = vtanh.pop %v626
  %v628 = vmul.f32 %v627, 0.5
  %v629 = vadd.f32 %v628, 0.5
  %v630 = vsel %vm29, %v627, %v629
  %v631 = vmul.f32 %v630, %v548
  %633 = vrot.lane.b32.xlu0 %v630, 64
  %v634 = vpop.permute.xlu0 %633
  %v636 = vmul.f32 %v630, %v634
  %638 = vrot.lane.b32.xlu0 %v636, 32
  %v639 = vpop.permute.xlu0 %638
  %v641 = vadd.f32 %v631, %v639
  %v642 = vtanh.pop %v641
  %644 = vrot.lane.b32.xlu0 %v642, 64
  %v645 = vpop.permute.xlu0 %644
  %v647 = vmul.f32 %v630, %v645
  %649 = vrot.lane.b32.xlu0 %v647, 32
  %v650 = vpop.permute.xlu0 %649
  %v652 = vsel %vm132, %v650, %v641
  %s653 = scalar_lea.vmem %s2, 40
  %654 = vst.msk [vmem:[%s653] sm:$0xff] %vm32, %v652
  %s655 = scalar_lea.vmem %s0, 48
  %v656 = vld [vmem:[%s655] sm:$0xff]
  %v658 = vsel %vm32, %v652, 0
  %660 = vmatprep.subr.mxu0 0.0
  %661 = vmatpush1.msra.mxu0 %v17
  %662 = vmatprep.subr.mxu0 0.0
  %663 = vmatpush1.msra.mxu0 %v18
  %664 = vmatprep.subr.mxu0 0.0
  %665 = vmatpush1.msra.mxu0 %v19
  %666 = vmatprep.subr.mxu0 0.0
  %667 = vmatpush1.msra.mxu0 %v20
  %668 = vmatprep.subr.mxu0 0.0
  %669 = vmatpush1.msra.mxu0 %v21
  %670 = vmatprep.subr.mxu0 0.0
  %671 = vmatpush1.msra.mxu0 %v22
  %672 = vmatprep.subr.mxu0 0.0
  %673 = vmatpush1.msra.mxu0 %v23
  %674 = vmatprep.subr.mxu0 0.0
  %675 = vmatpush1.msra.mxu0 %v24
  %676 = vmatprep.subr.mxu0 0.0
  %677 = vmatpush1.msra.mxu0 0.0
  %678 = vmatprep.subr.mxu0 0.0
  %679 = vmatpush1.msra.mxu0 0.0
  %680 = vmatprep.subr.mxu0 0.0
  %681 = vmatpush1.msra.mxu0 0.0
  %682 = vmatprep.subr.mxu0 0.0
  %683 = vmatpush1.msra.mxu0 0.0
  %684 = vmatprep.subr.mxu0 0.0
  %685 = vmatpush1.msra.mxu0 0.0
  %686 = vmatprep.subr.mxu0 0.0
  %687 = vmatpush1.msra.mxu0 0.0
  %688 = vmatprep.subr.mxu0 0.0
  %689 = vmatpush1.msra.mxu0 0.0
  %690 = vmatprep.subr.mxu0 0.0
  %691 = vmatpush1.msra.mxu0 0.0
  %692 = vmatprep.subr.mxu0 0.0
  %693 = vmatpush1.msra.mxu0 0.0
  %694 = vmatprep.subr.mxu0 0.0
  %695 = vmatpush1.msra.mxu0 0.0
  %696 = vmatprep.subr.mxu0 0.0
  %697 = vmatpush1.msra.mxu0 0.0
  %698 = vmatprep.subr.mxu0 0.0
  %699 = vmatpush1.msra.mxu0 0.0
  %700 = vmatprep.subr.mxu0 0.0
  %701 = vmatpush1.msra.mxu0 0.0
  %702 = vmatprep.subr.mxu0 0.0
  %703 = vmatpush1.msra.mxu0 0.0
  %704 = vmatprep.subr.mxu0 0.0
  %705 = vmatpush1.msra.mxu0 0.0
  %706 = vmatprep.subr.mxu0 0.0
  %707 = vmatpush1.msra.mxu0 0.0
  %708 = vmatprep.subr.mxu0 0.0
  %709 = vmatpush1.msra.mxu0 0.0
  %710 = vmatprep.subr.mxu0 0.0
  %711 = vmatpush1.msra.mxu0 0.0
  %712 = vmatprep.subr.mxu0 0.0
  %713 = vmatpush1.msra.mxu0 0.0
  %714 = vmatprep.subr.mxu0 0.0
  %715 = vmatpush1.msra.mxu0 0.0
  %716 = vmatprep.subr.mxu0 0.0
  %717 = vmatpush1.msra.mxu0 0.0
  %718 = vmatprep.subr.mxu0 0.0
  %719 = vmatpush1.msra.mxu0 0.0
  %720 = vmatprep.subr.mxu0 0.0
  %721 = vmatpush1.msra.mxu0 0.0
  %722 = vmatprep.subr.mxu0 0.0
  %723 = vmatpush1.msra.mxu0 0.0
  %724 = vmatprep.mubr.f32.mxu0 0.0
  %725 = vmatmul.mubr.f32.gmra.mrb[0].mxu0 %v658
  %v726 = vpop.f32.mrb[0].mxu0
  %v727 = vadd.f32 0.0, %v726
  %v728 = vpop.f32.mrb[0].mxu0
  %729 = vdwg.mxu0
  %v730 = vadd.f32 %v656, %v727
  %v731 = vtanh.pop %v730
  %v732 = vmul.f32 %v731, 0.5
  %v733 = vadd.f32 %v732, 0.5
  %v734 = vsel %vm29, %v731, %v733
  %v735 = vmul.f32 %v734, %v652
  %737 = vrot.lane.b32.xlu0 %v734, 64
  %v738 = vpop.permute.xlu0 %737
  %v740 = vmul.f32 %v734, %v738
  %742 = vrot.lane.b32.xlu0 %v740, 32
  %v743 = vpop.permute.xlu0 %742
  %v745 = vadd.f32 %v735, %v743
  %v746 = vtanh.pop %v745
  %748 = vrot.lane.b32.xlu0 %v746, 64
  %v749 = vpop.permute.xlu0 %748
  %v751 = vmul.f32 %v734, %v749
  %753 = vrot.lane.b32.xlu0 %v751, 32
  %v754 = vpop.permute.xlu0 %753
  %v756 = vsel %vm132, %v754, %v745
  %s757 = scalar_lea.vmem %s2, 48
  %758 = vst.msk [vmem:[%s757] sm:$0xff] %vm32, %v756
  %s759 = scalar_lea.vmem %s0, 56
  %v760 = vld [vmem:[%s759] sm:$0xff]
  %v762 = vsel %vm32, %v756, 0
  %764 = vmatprep.subr.mxu0 0.0
  %765 = vmatpush1.msra.mxu0 %v17
  %766 = vmatprep.subr.mxu0 0.0
  %767 = vmatpush1.msra.mxu0 %v18
  %768 = vmatprep.subr.mxu0 0.0
  %769 = vmatpush1.msra.mxu0 %v19
  %770 = vmatprep.subr.mxu0 0.0
  %771 = vmatpush1.msra.mxu0 %v20
  %772 = vmatprep.subr.mxu0 0.0
  %773 = vmatpush1.msra.mxu0 %v21
  %774 = vmatprep.subr.mxu0 0.0
  %775 = vmatpush1.msra.mxu0 %v22
  %776 = vmatprep.subr.mxu0 0.0
  %777 = vmatpush1.msra.mxu0 %v23
  %778 = vmatprep.subr.mxu0 0.0
  %779 = vmatpush1.msra.mxu0 %v24
  %780 = vmatprep.subr.mxu0 0.0
  %781 = vmatpush1.msra.mxu0 0.0
  %782 = vmatprep.subr.mxu0 0.0
  %783 = vmatpush1.msra.mxu0 0.0
  %784 = vmatprep.subr.mxu0 0.0
  %785 = vmatpush1.msra.mxu0 0.0
  %786 = vmatprep.subr.mxu0 0.0
  %787 = vmatpush1.msra.mxu0 0.0
  %788 = vmatprep.subr.mxu0 0.0
  %789 = vmatpush1.msra.mxu0 0.0
  %790 = vmatprep.subr.mxu0 0.0
  %791 = vmatpush1.msra.mxu0 0.0
  %792 = vmatprep.subr.mxu0 0.0
  %793 = vmatpush1.msra.mxu0 0.0
  %794 = vmatprep.subr.mxu0 0.0
  %795 = vmatpush1.msra.mxu0 0.0
  %796 = vmatprep.subr.mxu0 0.0
  %797 = vmatpush1.msra.mxu0 0.0
  %798 = vmatprep.subr.mxu0 0.0
  %799 = vmatpush1.msra.mxu0 0.0
  %800 = vmatprep.subr.mxu0 0.0
  %801 = vmatpush1.msra.mxu0 0.0
  %802 = vmatprep.subr.mxu0 0.0
  %803 = vmatpush1.msra.mxu0 0.0
  %804 = vmatprep.subr.mxu0 0.0
  %805 = vmatpush1.msra.mxu0 0.0
  %806 = vmatprep.subr.mxu0 0.0
  %807 = vmatpush1.msra.mxu0 0.0
  %808 = vmatprep.subr.mxu0 0.0
  %809 = vmatpush1.msra.mxu0 0.0
  %810 = vmatprep.subr.mxu0 0.0
  %811 = vmatpush1.msra.mxu0 0.0
  %812 = vmatprep.subr.mxu0 0.0
  %813 = vmatpush1.msra.mxu0 0.0
  %814 = vmatprep.subr.mxu0 0.0
  %815 = vmatpush1.msra.mxu0 0.0
  %816 = vmatprep.subr.mxu0 0.0
  %817 = vmatpush1.msra.mxu0 0.0
  %818 = vmatprep.subr.mxu0 0.0
  %819 = vmatpush1.msra.mxu0 0.0
  %820 = vmatprep.subr.mxu0 0.0
  %821 = vmatpush1.msra.mxu0 0.0
  %822 = vmatprep.subr.mxu0 0.0
  %823 = vmatpush1.msra.mxu0 0.0
  %824 = vmatprep.subr.mxu0 0.0
  %825 = vmatpush1.msra.mxu0 0.0
  %826 = vmatprep.subr.mxu0 0.0
  %827 = vmatpush1.msra.mxu0 0.0
  %828 = vmatprep.mubr.f32.mxu0 0.0
  %829 = vmatmul.mubr.f32.gmra.mrb[0].mxu0 %v762
  %v830 = vpop.f32.mrb[0].mxu0
  %v831 = vadd.f32 0.0, %v830
  %v832 = vpop.f32.mrb[0].mxu0
  %833 = vdwg.mxu0
  %v834 = vadd.f32 %v760, %v831
  %v835 = vtanh.pop %v834
  %v836 = vmul.f32 %v835, 0.5
  %v837 = vadd.f32 %v836, 0.5
  %v838 = vsel %vm29, %v835, %v837
  %v839 = vmul.f32 %v838, %v756
  %841 = vrot.lane.b32.xlu0 %v838, 64
  %v842 = vpop.permute.xlu0 %841
  %v844 = vmul.f32 %v838, %v842
  %846 = vrot.lane.b32.xlu0 %v844, 32
  %v847 = vpop.permute.xlu0 %846
  %v849 = vadd.f32 %v839, %v847
  %v850 = vtanh.pop %v849
  %852 = vrot.lane.b32.xlu0 %v850, 64
  %v853 = vpop.permute.xlu0 %852
  %v855 = vmul.f32 %v838, %v853
  %857 = vrot.lane.b32.xlu0 %v855, 32
  %v858 = vpop.permute.xlu0 %857
  %v860 = vsel %vm132, %v858, %v849
  %s861 = scalar_lea.vmem %s2, 56
  %862 = vst.msk [vmem:[%s861] sm:$0xff] %vm32, %v860
  %863 = vst.msk [vmem:[#allocation2] sm:$0xff] %vm32, %v860
  // Predicated region
  $region14: #{arlstm_forward.1} parent=0 // pred_check
    _
  $region15: #{arlstm_forward.1} parent=0 // pred_check_branch
    %865 = sbr.rel (0) target = $region17
  $region16: #{arlstm_forward.1} parent=0 // pred_region
    _
  $region17: #{arlstm_forward.1} parent=0 // pred_fallthru
    _
  // Predicated region
  $region18: #{arlstm_forward.1} parent=0 // pred_check
    _
  $region19: #{arlstm_forward.1} parent=0 // pred_check_branch
    %867 = sbr.rel (0) target = $region21
  $region20: #{arlstm_forward.1} parent=0 // pred_region
    _
  $region21: #{arlstm_forward.1} parent=0 // pred_fallthru
    _

</llo_original>
